<compile_context>
chip_gen: v5e
topology: v5e:2x2
jax: 0.10.0
libtpu: 0.0.40
codegen_flags: <defaults>
</compile_context>

<pallas_src>
import functools

import jax
import jax.numpy as jnp
from jax.experimental import pallas as pl
from jax.experimental.pallas import tpu as pltpu


def _shift_lanes(x, s):
    """Return y with y[:, l] = x[:, l + s] where in-bounds, else 0 (static s)."""
    if s == 0:
        return x
    c, L = x.shape
    fill = jnp.zeros((c, abs(s)), x.dtype)
    if s > 0:
        return jnp.concatenate([x[:, s:], fill], axis=1)
    return jnp.concatenate([fill, x[:, : L + s]], axis=1)


def _conv1d_lrelu_kernel(x_ref, w_ref, b_ref, o_ref, *, K, pad,
                         negative_slope, matmul_dtype):
    # x_ref: (1, C_in, L)       one batch element, L on the lane axis
    # w_ref: (C_out, K * C_in)  taps flattened into the contraction dim
    # b_ref: (C_out, 1)
    # o_ref: (1, C_out, L)      lane-dense output
    x = x_ref[0]                                                   # (C_in, L)

    # In-kernel im2col: row k*C_in + ci holds x[ci, l + k - pad] with zero fill
    # at the borders ('same' padding handled here, no wrapper jnp.pad).
    cols = [_shift_lanes(x, k - pad) for k in range(K)]
    xcol = cols[0] if K == 1 else jnp.concatenate(cols, axis=0)    # (K*C_in, L)

    # Single fused contraction over K*C_in (f32 accumulation on the MXU).
    acc = jnp.dot(w_ref[...].astype(matmul_dtype),
                  xcol.astype(matmul_dtype),
                  preferred_element_type=jnp.float32)              # (C_out, L)
    acc = acc + b_ref[...]                       # (C_out, 1) broadcast over lanes

    # LeakyReLU(negative_slope); Dropout(p=0) is the identity.
    o_ref[0] = jnp.where(acc >= 0, acc, negative_slope * acc).astype(o_ref.dtype)


def conv_block(x_ncl, weight, bias, *, negative_slope=0.01, use_bf16_matmul=False):
    """Pallas equivalent of Conv(in, out, k).forward (Conv1d + LeakyReLU + Dropout(0)).

    x_ncl:  (N, C_in, L)   float32, PyTorch Conv1d layout (kept as-is)
    weight: (C_out, C_in, K)
    bias:   (C_out,)
    returns (N, C_out, L)

    use_bf16_matmul: optional v6e/v7x speed knob (bf16 MXU inputs, f32 accumulate).
    """
    n, c_in, L = x_ncl.shape
    c_out, c_in_w, K = weight.shape
    assert c_in_w == c_in
    # 'same' padding with pad=(K-1)//2 only matches Conv1d output length for odd K.
    assert K % 2 == 1, "conv_block requires an odd kernel_size"
    pad = (K - 1) // 2
    assert pad < L

    # (C_out, C_in, K) -> (C_out, K*C_in) matching the kernel's im2col row order
    # (row index = k * C_in + ci).  Tiny one-time reshuffle.
    w_flat = jnp.transpose(weight, (0, 2, 1)).reshape(c_out, K * c_in)
    b_2d = bias.reshape(c_out, 1)

    matmul_dtype = jnp.bfloat16 if use_bf16_matmul else x_ncl.dtype

    kernel = functools.partial(
        _conv1d_lrelu_kernel, K=K, pad=pad,
        negative_slope=negative_slope, matmul_dtype=matmul_dtype)

    return pl.pallas_call(
        kernel,
        out_shape=jax.ShapeDtypeStruct((n, c_out, L), x_ncl.dtype),
        grid_spec=pltpu.PrefetchScalarGridSpec(
            num_scalar_prefetch=0,
            grid=(n,),
            in_specs=[
                pl.BlockSpec((1, c_in, L), lambda b: (b, 0, 0)),
                pl.BlockSpec((c_out, K * c_in), lambda b: (0, 0)),
                pl.BlockSpec((c_out, 1), lambda b: (0, 0)),
            ],
            out_specs=pl.BlockSpec((1, c_out, L), lambda b: (b, 0, 0)),
        ),
        compiler_params=pltpu.CompilerParams(
            # batch axis is embarrassingly parallel -> shards across v7x's 2 TCs
            dimension_semantics=("parallel",),
        ),
    )(x_ncl, w_flat, b_2d)


def _reference(x_ncl, weight, bias, negative_slope=0.01):
    """Pure-JAX reference (same math as torch Conv1d + LeakyReLU + Dropout(0))."""
    y = jax.lax.conv_general_dilated(
        x_ncl, weight,
        window_strides=(1,),
        padding=[((weight.shape[-1] - 1) // 2,) * 2],
        dimension_numbers=("NCH", "OIH", "NCH"),
    ) + bias[None, :, None]
    return jnp.where(y >= 0, y, negative_slope * y)


if __name__ == "__main__":
    # Module config: Conv(in_channels=4, out_channels=8, kernel_size=3, dropout=0)
    N, C_IN, C_OUT, K, L = 2, 4, 8, 3, 16

    key = jax.random.PRNGKey(0)
    kx, kw, kb = jax.random.split(key, 3)

    x = jax.random.normal(kx, (N, C_IN, L), dtype=jnp.float32)
    # Deterministic init matching Conv1d's default fan_in-scaled uniform bound.
    bound = 1.0 / (C_IN * K) ** 0.5
    weight = jax.random.uniform(kw, (C_OUT, C_IN, K), jnp.float32, -bound, bound)
    bias = jax.random.uniform(kb, (C_OUT,), jnp.float32, -bound, bound)

    out = conv_block(x, weight, bias)
    out = jax.block_until_ready(out)

    ref = _reference(x, weight, bias)
    assert out.shape == (N, C_OUT, L)
    assert jnp.allclose(out, ref, atol=1e-5, rtol=1e-5)

    print("KERNEL_OK")
</pallas_src>

<mosaic_0001>
module attributes {stable_mosaic.version = 11 : i64} {
  func.func @_conv1d_lrelu_kernel(%arg0: i32, %arg1: memref<1x4x16xf32, #tpu.memory_space<vmem>>, %arg2: memref<8x12xf32, #tpu.memory_space<vmem>>, %arg3: memref<8x1xf32, #tpu.memory_space<vmem>>, %arg4: memref<1x8x16xf32, #tpu.memory_space<vmem>>) attributes {dimension_semantics = [#tpu.dimension_semantics<parallel>], iteration_bounds = array<i64: 2>, scalar_prefetch = 0 : i64, scratch_operands = 0 : i64, tpu.core_type = #tpu.core_type<tc>, window_params = [{transform_indices = @transform_0, window_bounds = array<i64: 1, 4, 16>}, {pipeline_mode = #tpu.pipeline_mode<synchronous>, transform_indices = @transform_1, window_bounds = array<i64: 8, 12>}, {pipeline_mode = #tpu.pipeline_mode<synchronous>, transform_indices = @transform_2, window_bounds = array<i64: 8, 1>}, {transform_indices = @transform_3, window_bounds = array<i64: 1, 8, 16>}]} {
    %c0 = arith.constant 0 : index
    %c0_0 = arith.constant 0 : index
    %c0_1 = arith.constant 0 : index
    %0 = vector.load %arg1[%c0, %c0_0, %c0_1] : memref<1x4x16xf32, #tpu.memory_space<vmem>>, vector<1x4x16xf32>
    %1 = vector.shape_cast %0 : vector<1x4x16xf32> to vector<4x16xf32>
    %cst = arith.constant 0.000000e+00 : f32
    %2 = vector.broadcast %cst : f32 to vector<4x1xf32>
    %3 = vector.extract_strided_slice %1 {offsets = [0, 0], sizes = [4, 15], strides = [1, 1]} : vector<4x16xf32> to vector<4x15xf32>
    %4 = tpu.concatenate %2, %3 in 1 : vector<4x1xf32>, vector<4x15xf32> -> vector<4x16xf32>
    %cst_2 = arith.constant 0.000000e+00 : f32
    %5 = vector.broadcast %cst_2 : f32 to vector<4x1xf32>
    %6 = vector.extract_strided_slice %1 {offsets = [0, 1], sizes = [4, 15], strides = [1, 1]} : vector<4x16xf32> to vector<4x15xf32>
    %7 = tpu.concatenate %6, %5 in 1 : vector<4x15xf32>, vector<4x1xf32> -> vector<4x16xf32>
    %8 = tpu.concatenate %4, %1, %7 in 0 : vector<4x16xf32>, vector<4x16xf32>, vector<4x16xf32> -> vector<12x16xf32>
    %c0_3 = arith.constant 0 : index
    %c0_4 = arith.constant 0 : index
    %9 = vector.load %arg2[%c0_3, %c0_4] : memref<8x12xf32, #tpu.memory_space<vmem>>, vector<8x12xf32>
    %cst_5 = arith.constant dense<0.000000e+00> : vector<8x16xf32>
    %10 = tpu.matmul %9, %8, %cst_5 {dimension_numbers = #tpu.dot_dimension_numbers<[1], [0], [0], [1], [0, 0, 1, 1], [], []>} : vector<8x12xf32>, vector<12x16xf32>, vector<8x16xf32> -> vector<8x16xf32>
    %c0_6 = arith.constant 0 : index
    %c0_7 = arith.constant 0 : index
    %11 = vector.load %arg3[%c0_6, %c0_7] : memref<8x1xf32, #tpu.memory_space<vmem>>, vector<8x1xf32>
    %12 = vector.broadcast %11 : vector<8x1xf32> to vector<8x16xf32>
    %13 = arith.addf %10, %12 : vector<8x16xf32>
    %cst_8 = arith.constant 0.000000e+00 : f32
    %14 = vector.broadcast %cst_8 : f32 to vector<8x16xf32>
    %15 = arith.cmpf oge, %13, %14 : vector<8x16xf32>
    %cst_9 = arith.constant 0.00999999977 : f32
    %16 = vector.broadcast %cst_9 : f32 to vector<8x16xf32>
    %17 = arith.mulf %16, %13 : vector<8x16xf32>
    %18 = arith.select %15, %13, %17 : vector<8x16xi1>, vector<8x16xf32>
    %c0_10 = arith.constant 0 : index
    %c0_11 = arith.constant 0 : index
    %c0_12 = arith.constant 0 : index
    %19 = vector.load %arg4[%c0_10, %c0_11, %c0_12] : memref<1x8x16xf32, #tpu.memory_space<vmem>>, vector<1x8x16xf32>
    %20 = vector.shape_cast %19 : vector<1x8x16xf32> to vector<8x16xf32>
    %21 = vector.shape_cast %18 : vector<8x16xf32> to vector<1x8x16xf32>
    tpu.vector_store %arg4[%c0_10, %c0_11, %c0_12], %21 {strides = array<i32>} : memref<1x8x16xf32, #tpu.memory_space<vmem>>, vector<1x8x16xf32>,
    return
  }
  func.func @transform_0(%arg0: i32) -> (i32, i32, i32) {
    %c0_i32 = arith.constant 0 : i32
    %c0_i32_0 = arith.constant 0 : i32
    %c0_i32_1 = arith.constant 0 : i32
    return %arg0, %c0_i32, %c0_i32_0 : i32, i32, i32
  }
  func.func @transform_1(%arg0: i32) -> (i32, i32) {
    %c0_i32 = arith.constant 0 : i32
    %c0_i32_0 = arith.constant 0 : i32
    %c0_i32_1 = arith.constant 0 : i32
    return %c0_i32, %c0_i32_0 : i32, i32
  }
  func.func @transform_2(%arg0: i32) -> (i32, i32) {
    %c0_i32 = arith.constant 0 : i32
    %c0_i32_0 = arith.constant 0 : i32
    %c0_i32_1 = arith.constant 0 : i32
    return %c0_i32, %c0_i32_0 : i32, i32
  }
  func.func @transform_3(%arg0: i32) -> (i32, i32, i32) {
    %c0_i32 = arith.constant 0 : i32
    %c0_i32_0 = arith.constant 0 : i32
    %c0_i32_1 = arith.constant 0 : i32
    return %arg0, %c0_i32, %c0_i32_0 : i32, i32, i32
  }
}

</mosaic_0001>

<llo_original>
// kernel: tpu_custom_call.1
$region0: #{tpu_custom_call.1}
  #allocation0 [shape = 'u32[]', space=smem, size = 0x4, offset = 0x4, fixed_abs, tag = 'smem constant byte address 0x4 - core index']
  #allocation1 [shape = 'u32[72,128]{1,0:T(1,128)}', space=vmem, size = 0x9000, scoped, tag = 'internal scratch']
  %s0 = inlined_call_operand.vmem [shape: f32[2,4,16], index: 0, kind: input, shape index: {}]
  %s1 = inlined_call_operand.hbm [shape: f32[8,12], index: 1, kind: input, shape index: {}]
  %s2 = inlined_call_operand.vmem [shape: f32[8,1], index: 2, kind: input, shape index: {}]
  %s3 = inlined_call_operand.hbm [shape: f32[2,8,16], index: 3, kind: output, shape index: {}]
  %s4 = sld [smem:[#allocation0]]
  $region49: #{tpu_custom_call.1} parent=0
    _
  %s6 = ssub.s32 1, %s4
  %s7 = scalar_select 0, %s6, %s4
  $region1: #{tpu_custom_call.1} parent=0
    #allocation2 [shape = 'u8[4096]{0}', space=vmem, size = 0x1000, scoped, tag = 'input window, operand 1, single buffered']
    #allocation3 [shape = 's32[2]{0}', space=sflag, size = 0x8, scoped, tag = 'scoped memory for tpu_custom_call.1']
    #allocation4 [shape = 's32[2]{0}', space=sflag, size = 0x8, scoped, tag = 'scoped memory for tpu_custom_call.1']
    #allocation5 [shape = 'u8[8192]{0}', space=vmem, size = 0x2000, scoped, tag = 'output window, operand 0']
    %8 = vsyncpa [#allocation3], 0
    %9 = vsyncpa [#allocation4], 0
    %s10 = scalar_lea.sflag [#allocation4], 1
    %11 = vsyncpa %s10, 0
    loop: start=0, step=1, limit=4
    $region2: #{tpu_custom_call.1} parent=1 // loop_pre_header
      _
    $region3: #{tpu_custom_call.1} parent=1 // loop_header
      %s13 = sphi 0, %s17
      %p14 = scmp.ge.s32.totalorder %s13, 4
      %s23 = sphi 0, %s25
      %s26 = sphi 0, %s23
      %s27 = sphi 0, %s26
      %s43 = sphi 0, %s27
      %s47 = sphi 0, %s47
      %s49 = sphi 0, %s47
      %s50 = sphi 0, %s49
      %s64 = sphi 0, %s50
      %s68 = sphi 0, %s68
      %s70 = sphi 0, %s68
      %s71 = sphi 0, %s70
      %s85 = sphi 0, %s71
      %s91 = sphi 0, %s93
      %s94 = sphi 0, %s91
      %s95 = sphi 0, %s94
      %s111 = sphi 0, %s95
    $region4: #{tpu_custom_call.1} parent=1 // loop_header_branch
      %16 = sbr.rel (%p14) target = $region8
    $region5: #{tpu_custom_call.1} parent=1 // loop_body
      %s18 = ssub.s32 %s13, 1
      %s19 = ssub.s32 %s13, 2
      %s20 = sadd.s32 %s13, 1
      %s21 = ssub.s32 %s13, %s20
      %p22 = scmp.eq.s32.totalorder %s21, 0
      %s24 = sadd.s32 %s23, 1
      %s25 = scalar_select %p22, %s23, %s24
      %p28 = pneg %p22
      %p29 = scmp.eq.s32.totalorder %s13, 1
      %p30 = por %p28, %p29
      %p31 = scmp.ne.s32.totalorder %s23, %s26
      %p32 = scmp.eq.s32.totalorder %s13, 0
      %p33 = por %p31, %p32
      %p34 = scmp.ne.s32.totalorder %s23, %s26
      %p35 = scmp.eq.s32.totalorder %s18, 1
      %p36 = por %p34, %p35
      %p37 = scmp.ne.s32.totalorder %s26, %s27
      %p38 = scmp.eq.s32.totalorder %s18, 0
      %p39 = por %p37, %p38
      %p40 = scmp.ne.s32.totalorder %s26, %s27
      %p41 = scmp.eq.s32.totalorder %s19, 1
      %p42 = por %p40, %p41
      %p44 = scmp.ne.s32.totalorder %s27, %s43
      %p45 = scmp.eq.s32.totalorder %s19, 0
      %p46 = por %p44, %p45
      %s48 = sadd.s32 %s47, 1
      %p51 = scmp.eq.s32.totalorder %s13, 1
      %p52 = scmp.ne.s32.totalorder %s47, %s49
      %p53 = scmp.eq.s32.totalorder %s13, 0
      %p54 = por %p52, %p53
      %p55 = scmp.ne.s32.totalorder %s47, %s49
      %p56 = scmp.eq.s32.totalorder %s18, 1
      %p57 = por %p55, %p56
      %p58 = scmp.ne.s32.totalorder %s49, %s50
      %p59 = scmp.eq.s32.totalorder %s18, 0
      %p60 = por %p58, %p59
      %p61 = scmp.ne.s32.totalorder %s49, %s50
      %p62 = scmp.eq.s32.totalorder %s19, 1
      %p63 = por %p61, %p62
      %p65 = scmp.ne.s32.totalorder %s50, %s64
      %p66 = scmp.eq.s32.totalorder %s19, 0
      %p67 = por %p65, %p66
      %s69 = sadd.s32 %s68, 1
      %p72 = scmp.eq.s32.totalorder %s13, 1
      %p73 = scmp.ne.s32.totalorder %s68, %s70
      %p74 = scmp.eq.s32.totalorder %s13, 0
      %p75 = por %p73, %p74
      %p76 = scmp.ne.s32.totalorder %s68, %s70
      %p77 = scmp.eq.s32.totalorder %s18, 1
      %p78 = por %p76, %p77
      %p79 = scmp.ne.s32.totalorder %s70, %s71
      %p80 = scmp.eq.s32.totalorder %s18, 0
      %p81 = por %p79, %p80
      %p82 = scmp.ne.s32.totalorder %s70, %s71
      %p83 = scmp.eq.s32.totalorder %s19, 1
      %p84 = por %p82, %p83
      %p86 = scmp.ne.s32.totalorder %s71, %s85
      %p87 = scmp.eq.s32.totalorder %s19, 0
      %p88 = por %p86, %p87
      %s89 = ssub.s32 %s13, %s20
      %p90 = scmp.eq.s32.totalorder %s89, 0
      %s92 = sadd.s32 %s91, 1
      %s93 = scalar_select %p90, %s91, %s92
      %p96 = pneg %p90
      %p97 = scmp.eq.s32.totalorder %s13, 1
      %p98 = por %p96, %p97
      %p99 = scmp.ne.s32.totalorder %s91, %s94
      %p100 = scmp.eq.s32.totalorder %s13, 0
      %p101 = por %p99, %p100
      %p102 = scmp.ne.s32.totalorder %s91, %s94
      %p103 = scmp.eq.s32.totalorder %s18, 1
      %p104 = por %p102, %p103
      %p105 = scmp.ne.s32.totalorder %s94, %s95
      %p106 = scmp.eq.s32.totalorder %s18, 0
      %p107 = por %p105, %p106
      %p108 = scmp.ne.s32.totalorder %s94, %s95
      %p109 = scmp.eq.s32.totalorder %s19, 1
      %p110 = por %p108, %p109
      %p112 = scmp.ne.s32.totalorder %s95, %s111
      %p113 = scmp.eq.s32.totalorder %s19, 0
      %p114 = por %p112, %p113
      %p115 = scmp.le.s32.totalorder 1, %s13
      %p116 = scmp.lt.s32.totalorder %s13, 3
      %p117 = pnand %p115, %p116
      %p118 = pneg %p117
      // Predicated region
      $region9: #{tpu_custom_call.1} parent=5 // pred_check
        _
      $region10: #{tpu_custom_call.1} parent=5 // pred_check_branch
        %120 = sbr.rel (%p117) target = $region12
      $region11: #{tpu_custom_call.1} parent=5 // pred_region
        %s121 = ssub.s32 %s13, 1
        // Predicated region
        $region13: #{tpu_custom_call.1} parent=11 // pred_check
          %p122 = pneg %p60
        $region14: #{tpu_custom_call.1} parent=11 // pred_check_branch
          %124 = sbr.rel (%p122) target = $region16
        $region15: #{tpu_custom_call.1} parent=11 // pred_region
          %126 = vsyncadd [#allocation3], 0
          %s128 = sshll.u32 %s1, 4
          %s129 = int_to_ptr.hbm [resolvable:$true] %s128
          %s130 = sshll.u32 [#allocation2], 4
          %s131 = int_to_ptr.vmem [resolvable:$true] %s130
          %133 = dma.hbm_to_vmem [thread:$0]  %s129, 128, %s131, [#allocation3]
        $region16: #{tpu_custom_call.1} parent=11 // pred_fallthru
          _
        // Predicated region
        $region17: #{tpu_custom_call.1} parent=11 // pred_check
          %p134 = pneg %p81
        $region18: #{tpu_custom_call.1} parent=11 // pred_check_branch
          %136 = sbr.rel (%p134) target = $region20
        $region19: #{tpu_custom_call.1} parent=11 // pred_region
          _
        $region20: #{tpu_custom_call.1} parent=11 // pred_fallthru
          _
      $region12: #{tpu_custom_call.1} parent=5 // pred_fallthru
        _
      %p137 = scmp.lt.s32.totalorder %s13, 2
      // Predicated region
      $region21: #{tpu_custom_call.1} parent=5 // pred_check
        %p138 = pneg %p137
      $region22: #{tpu_custom_call.1} parent=5 // pred_check_branch
        %140 = sbr.rel (%p138) target = $region24
      $region23: #{tpu_custom_call.1} parent=5 // pred_region
        // Predicated region
        $region25: #{tpu_custom_call.1} parent=23 // pred_check
          %p141 = pneg %p33
        $region26: #{tpu_custom_call.1} parent=23 // pred_check_branch
          %143 = sbr.rel (%p141) target = $region28
        $region27: #{tpu_custom_call.1} parent=23 // pred_region
          %p144 = scmp.lt.s32.totalorder %s13, 1
          %s145 = scalar_select %p144, %s13, 1
          %s146 = smul.addr %s145, 4
          %s147 = scalar_lea.vmem %s0, %s146
        $region28: #{tpu_custom_call.1} parent=23 // pred_fallthru
          _
      $region24: #{tpu_custom_call.1} parent=5 // pred_fallthru
        _
      %p148 = scmp.le.s32.totalorder 1, %s13
      %p149 = scmp.lt.s32.totalorder %s13, 3
      %p150 = pnand %p148, %p149
      %p151 = pneg %p150
      // Predicated region
      $region29: #{tpu_custom_call.1} parent=5 // pred_check
        _
      $region30: #{tpu_custom_call.1} parent=5 // pred_check_branch
        %153 = sbr.rel (%p150) target = $region32
      $region31: #{tpu_custom_call.1} parent=5 // pred_region
        %s154 = ssub.s32 %s13, 1
        // Predicated region
        $region33: #{tpu_custom_call.1} parent=31 // pred_check
          %p155 = pneg %p60
        $region34: #{tpu_custom_call.1} parent=31 // pred_check_branch
          %157 = sbr.rel (%p155) target = $region36
        $region35: #{tpu_custom_call.1} parent=31 // pred_region
          %159 = dma.done [#allocation3], 128
        $region36: #{tpu_custom_call.1} parent=31 // pred_fallthru
          _
        %p160 = scmp.lt.s32.totalorder %s18, 1
        %s161 = scalar_select %p160, %s18, 1
        %s162 = smul.addr %s161, 4
        %s163 = scalar_lea.vmem %s0, %s162
        %p164 = pneg %p39
        %p165 = pneg %p36
        %p166 = pneg %p60
        %p167 = pneg %p57
        %p168 = pneg %p81
        %p169 = pneg %p78
        %p170 = pneg %p107
        %p171 = pneg %p104
        %s172 = sand.u32 %s94, 1
        %s173 = scalar_lea.sflag [#allocation4], %s172
        %s174 = sand.u32 %s94, 1
        %s175 = smul.addr %s174, 8
        %s176 = scalar_lea.vmem [#allocation5], %s175
        %p177 = scmp.lt.s32.totalorder %s18, 1
        %s178 = scalar_select %p177, %s18, 1
        %s179 = smul.addr %s178, 4
        %s180 = scalar_lea.vmem %s0, %s179
        %v181 = vld [vmem:[%s180] sm:$0xf]
        %183 = vrot.lane.b32.xlu0 %v181, 1
        %v184 = vpop.permute.xlu0 %183
        %vm186 = vcmask 7168
        %v187 = vsel %vm186, 0.0, %v184
        %188 = vrot.lane.b32.xlu0 %v181, 127
        %v189 = vpop.permute.xlu0 %188
        %vm191 = vcmask 121856
        %v192 = vsel %vm191, %v189, 0.0
        %v193 = vrot.slane %v181, 4
        %vm195 = vcmask 1043456
        %v196 = vsel %vm195, %v187, %v193
        %v197 = vld [vmem:[#allocation2] sm:$0xff]
        %v198 = vld [vmem:[%s2] sm:$0xff]
        %200 = vset.pattern.permute.xlu0 0
        %201 = vperm.xlu0 %200, %v198
        %v202 = vpop.permute.xlu0 %201
        %vm204 = vcmask 97280
        %v206 = vsel %vm204, %v197, 0
        %v209 = vsel %vm195, %v192, 0
        %211 = vmatpush.msra.mxu0 0.0
        %212 = vmatpush.msra.mxu0 0.0
        %213 = vmatpush.msra.mxu0 0.0
        %214 = vmatpush.msra.mxu0 0.0
        %215 = vmatpush.msra.mxu0 0.0
        %216 = vmatpush.msra.mxu0 0.0
        %217 = vmatpush.msra.mxu0 0.0
        %218 = vmatpush.msra.mxu0 0.0
        %219 = vmatpush.msra.mxu0 0.0
        %220 = vmatpush.msra.mxu0 0.0
        %221 = vmatpush.msra.mxu0 0.0
        %222 = vmatpush.msra.mxu0 0.0
        %223 = vmatpush.msra.mxu0 0.0
        %224 = vmatpush.msra.mxu0 0.0
        %225 = vmatpush.msra.mxu0 %v209
        %226 = vmatpush.msra.mxu0 %v196
        %227 = vmatmul.f32.gmra.mxu0 %v206
        %v228 = vpop.f32.mrf.mxu0
        %v229 = vadd.f32 %v202, %v228
        %230 = vdwg.mxu0
        %vm231 = vcmp.ge.f32.partialorder %v229, 0.0
        %v232 = vmul.f32 %v229, 0.01
        %v233 = vsel %vm231, %v229, %v232
        %vm234 = vcmask 130048
        %235 = vst.msk [vmem:[%s176] sm:$0xff] %vm234, %v233
        %s236 = sand.u32 %s94, 1
        %s237 = scalar_lea.sflag [#allocation4], %s236
        %s238 = sand.u32 %s94, 1
        %s239 = smul.addr %s238, 8
        %s240 = scalar_lea.vmem [#allocation5], %s239
        // Predicated region
        $region37: #{tpu_custom_call.1} parent=31 // pred_check
          %p241 = pneg %p104
        $region38: #{tpu_custom_call.1} parent=31 // pred_check_branch
          %243 = sbr.rel (%p241) target = $region40
        $region39: #{tpu_custom_call.1} parent=31 // pred_region
          %245 = vsyncadd %s237, 0
          %s246 = smul.addr %s18, 8
          %s247 = scalar_lea.hbm %s3, %s246
          %s249 = sshll.u32 %s240, 4
          %s250 = int_to_ptr.vmem [resolvable:$true] %s249
          %s251 = sshll.u32 %s247, 4
          %s252 = int_to_ptr.hbm [resolvable:$true] %s251
          %254 = dma.vmem_to_hbm [thread:$0]  %s250, 128, %s252, %s237
        $region40: #{tpu_custom_call.1} parent=31 // pred_fallthru
          _
      $region32: #{tpu_custom_call.1} parent=5 // pred_fallthru
        _
      %p255 = scmp.le.s32.totalorder 2, %s13
      // Predicated region
      $region41: #{tpu_custom_call.1} parent=5 // pred_check
        %p256 = pneg %p255
      $region42: #{tpu_custom_call.1} parent=5 // pred_check_branch
        %258 = sbr.rel (%p256) target = $region44
      $region43: #{tpu_custom_call.1} parent=5 // pred_region
        %s259 = ssub.s32 %s13, 2
        // Predicated region
        $region45: #{tpu_custom_call.1} parent=43 // pred_check
          %p260 = pneg %p110
        $region46: #{tpu_custom_call.1} parent=43 // pred_check_branch
          %262 = sbr.rel (%p260) target = $region48
        $region47: #{tpu_custom_call.1} parent=43 // pred_region
          %s263 = sand.u32 %s95, 1
          %s264 = scalar_lea.sflag [#allocation4], %s263
          %s265 = sand.u32 %s95, 1
          %s266 = smul.addr %s265, 8
          %s267 = scalar_lea.vmem [#allocation5], %s266
          %269 = dma.done %s264, 128
        $region48: #{tpu_custom_call.1} parent=43 // pred_fallthru
          _
      $region44: #{tpu_custom_call.1} parent=5 // pred_fallthru
        _
    $region6: #{tpu_custom_call.1} parent=1 // loop_footer
      %s17 = sadd.s32 1, %s13
    $region7: #{tpu_custom_call.1} parent=1 // loop_footer_branch
      %12 = sbr.rel target = $region3
    $region8: #{tpu_custom_call.1} parent=1 // loop_exit
      _
    %270 = vsyncpa [#allocation3], 1
    %s271 = scalar_lea.sflag [#allocation3], 1
    %272 = vsyncpa %s271, 1
    %273 = vsyncpa [#allocation4], 1
    %s274 = scalar_lea.sflag [#allocation4], 1
    %275 = vsyncpa %s274, 1

</llo_original>
